<compile_context>
chip_gen: v5e
topology: v5e:2x2
jax: 0.10.0
libtpu: 0.0.40
codegen_flags: <defaults>
</compile_context>

<pallas_src>
import functools

import jax
import jax.numpy as jnp
from jax import lax
from jax.experimental import pallas as pl
from jax.experimental.pallas import tpu as pltpu

_EPS = 1e-12       # F.normalize default eps
_NUM_CORES = 2     # leading "parallel" grid axis: shards across the two
                   # TensorCores on v7x; plain sequential (no-op) on v5e/v6e.


def _simsiam_kernel(z1_ref, z2_ref, out_ref, acc_ref, *,
                    alpha, beta, n_valid, tm, bpc, apply_mask, eps):
    c = pl.program_id(0)            # core / outer parallel axis
    i = pl.program_id(1)            # row-block axis (carries the accumulator)
    last = pl.num_programs(1) - 1

    @pl.when(i == 0)
    def _init():
        acc_ref[...] = jnp.zeros_like(acc_ref)

    z1 = z1_ref[...]                # (TM, D), native dtype (bf16 stays packed)
    z2 = z2_ref[...]

    # Row-wise dot / squared norms; reductions accumulate in f32.
    dot = jnp.sum(z1 * z2, axis=-1, keepdims=True, dtype=jnp.float32)
    sq1 = jnp.sum(z1 * z1, axis=-1, keepdims=True, dtype=jnp.float32)
    sq2 = jnp.sum(z2 * z2, axis=-1, keepdims=True, dtype=jnp.float32)

    # 1/max(||z||, eps) == rsqrt(max(||z||^2, eps^2)); rsqrt runs on the EUP.
    eps_sq = eps * eps
    cos = (dot
           * lax.rsqrt(jnp.maximum(sq1, eps_sq))
           * lax.rsqrt(jnp.maximum(sq2, eps_sq)))          # (TM, 1) f32

    if apply_mask:
        blk = c * bpc + i           # *unclamped* global row-block index
        row0 = blk * tm
        is_full = row0 + tm <= n_valid

        @pl.when(is_full)           # full tiles skip the iota/compare/select
        def _acc_full():
            acc_ref[...] += cos

        @pl.when(jnp.logical_not(is_full))
        def _acc_masked():          # partial / duplicated tail tiles
            row = row0 + lax.broadcasted_iota(jnp.int32, (tm, 1), 0)
            acc_ref[...] += jnp.where(row < n_valid, cos, 0.0)
    else:
        acc_ref[...] += cos

    @pl.when(i == last)
    def _finalize():
        # loss = alpha*(-mean cos) + beta*(-mean cos) = -(alpha+beta)*mean cos
        scale = jnp.float32(-(alpha + beta) / n_valid)
        total = jnp.sum(acc_ref[...]) * scale              # per-core partial
        out_ref[...] = jnp.full((1, 128), total, dtype=jnp.float32)


def simsiam_loss(z1, z2, *, alpha=0.5, beta=0.5, block_rows=None,
                 target_block_bytes=2 << 20, eps=_EPS):
    """SimSiam forward loss.  z1, z2: (..., D) embeddings (f32 or bf16)."""
    assert z1.shape == z2.shape, (z1.shape, z2.shape)
    d = z1.shape[-1]
    z1 = z1.reshape(-1, d)
    z2 = z2.reshape(-1, d)
    n = z1.shape[0]
    itemsize = jnp.dtype(z1.dtype).itemsize

    # --- byte-driven row tile: ~target_block_bytes per input block, mult of 8.
    n_rup8 = pl.cdiv(n, 8) * 8
    tm = block_rows if block_rows is not None else target_block_bytes // (d * itemsize)
    tm = max(8, min(int(tm), 4096, n_rup8))
    tm = (tm // 8) * 8

    nb = pl.cdiv(n, tm)                          # number of data row-blocks
    num_cores = _NUM_CORES if nb >= 2 else 1
    bpc = pl.cdiv(nb, num_cores)                 # row-blocks per core
    apply_mask = (num_cores * bpc * tm) != n     # any padded / dup rows?

    def row_block_map(c, i):
        # Clamp so blocks past the data (odd split, partial tail) re-read the
        # last data block; the in-kernel row mask zeroes any row >= n.
        return (jnp.minimum(c * bpc + i, nb - 1), 0)

    kernel = functools.partial(
        _simsiam_kernel, alpha=float(alpha), beta=float(beta), n_valid=n,
        tm=tm, bpc=bpc, apply_mask=apply_mask, eps=float(eps))

    # 2 inputs x 2 pipeline buffers + f32 temporaries + slack; capped so it is
    # safe on v7x's 64 MiB physical VMEM.
    block_bytes = tm * d * itemsize
    vmem_need = 4 * block_bytes + 2 * tm * d * 4 + (2 << 20)
    vmem_limit = int(min(max(vmem_need, 32 << 20), 48 << 20))

    out = pl.pallas_call(
        kernel,
        out_shape=jax.ShapeDtypeStruct((1, 128 * num_cores), jnp.float32),
        grid=(num_cores, bpc),
        in_specs=[
            pl.BlockSpec((tm, d), row_block_map),
            pl.BlockSpec((tm, d), row_block_map),
        ],
        # Per-core partial loss lives in its own lane-aligned (1,128) stripe.
        out_specs=pl.BlockSpec((1, 128), lambda c, i: (0, c)),
        scratch_shapes=[pltpu.VMEM((tm, 1), jnp.float32)],
        compiler_params=pltpu.CompilerParams(
            dimension_semantics=("parallel", "arbitrary"),
            vmem_limit_bytes=vmem_limit),
        cost_estimate=pl.CostEstimate(
            flops=6 * n * d,
            transcendentals=2 * n,
            bytes_accessed=2 * n * d * itemsize + 128 * num_cores * 4),
    )(z1, z2)

    # Sum the per-core partials (lane 0 of each 128-lane stripe).
    return jnp.sum(out[0].reshape(num_cores, 128)[:, 0])


def _reference(z1, z2, *, alpha=0.5, beta=0.5, eps=_EPS):
    """Pure-JAX mirror of the PyTorch forward (for correctness checks)."""
    d = z1.shape[-1]
    z1 = z1.astype(jnp.float32).reshape(-1, d)
    z2 = z2.astype(jnp.float32).reshape(-1, d)

    def norm(x):
        return x / jnp.maximum(jnp.linalg.norm(x, axis=-1, keepdims=True), eps)

    sim_1 = -jnp.mean(jnp.sum(norm(z1) * norm(z2), axis=-1))
    sim_2 = -jnp.mean(jnp.sum(norm(z2) * norm(z1), axis=-1))
    return alpha * sim_1 + beta * sim_2


if __name__ == "__main__":
    key = jax.random.PRNGKey(0)
    k1, k2, k3, k4, k5, k6, k7, k8 = jax.random.split(key, 8)

    # Case 1: tiny single-block path (N=8, D=32).
    z1 = jax.random.normal(k1, (8, 32), jnp.float32)
    z2 = jax.random.normal(k2, (8, 32), jnp.float32)
    out = jax.block_until_ready(simsiam_loss(z1, z2))
    ref = _reference(z1, z2)
    assert jnp.allclose(out, ref, rtol=1e-4, atol=1e-5), (out, ref)

    # Case 2: partial block + in-kernel row mask (N=20 rows, no wrapper pad).
    z1 = jax.random.normal(k3, (20, 32), jnp.float32)
    z2 = jax.random.normal(k4, (20, 32), jnp.float32)
    out = jax.block_until_ready(simsiam_loss(z1, z2))
    ref = _reference(z1, z2)
    assert jnp.allclose(out, ref, rtol=1e-4, atol=1e-5), (out, ref)

    # Case 3: multi-block grid, 2-way core split, odd block count (clamped
    # duplicate tail block fully masked), non-default alpha/beta.
    z1 = jax.random.normal(k5, (300, 64), jnp.float32)
    z2 = jax.random.normal(k6, (300, 64), jnp.float32)
    out = jax.block_until_ready(
        simsiam_loss(z1, z2, alpha=0.7, beta=0.3, block_rows=64))
    ref = _reference(z1, z2, alpha=0.7, beta=0.3)
    assert jnp.allclose(out, ref, rtol=1e-4, atol=1e-5), (out, ref)

    # Case 4: bf16 inputs (products kept packed in bf16, f32 accumulation).
    z1 = jax.random.normal(k7, (128, 256), jnp.float32).astype(jnp.bfloat16)
    z2 = jax.random.normal(k8, (128, 256), jnp.float32).astype(jnp.bfloat16)
    out = jax.block_until_ready(simsiam_loss(z1, z2, block_rows=32))
    ref = _reference(z1, z2)
    assert jnp.allclose(out, ref, atol=5e-3), (out, ref)

    print("KERNEL_OK")
</pallas_src>

<mosaic_0001>
module attributes {stable_mosaic.version = 11 : i64} {
  func.func @_simsiam_kernel(%arg0: i32, %arg1: i32, %arg2: memref<8x32xf32, #tpu.memory_space<vmem>>, %arg3: memref<8x32xf32, #tpu.memory_space<vmem>>, %arg4: memref<1x128xf32, #tpu.memory_space<vmem>>, %arg5: memref<8x1xf32, #tpu.memory_space<vmem>>) attributes {dimension_semantics = [#tpu.dimension_semantics<parallel>, #tpu.dimension_semantics<arbitrary>], iteration_bounds = array<i64: 1, 1>, scalar_prefetch = 0 : i64, scratch_operands = 1 : i64, tpu.core_type = #tpu.core_type<tc>, window_params = [{transform_indices = @transform_0, window_bounds = array<i64: 8, 32>}, {transform_indices = @transform_1, window_bounds = array<i64: 8, 32>}, {transform_indices = @transform_2, window_bounds = array<i64: 1, 128>}]} {
    %c0_i32 = arith.constant 0 : i32
    %0 = arith.cmpi eq, %arg1, %c0_i32 : i32
    %1 = arith.extui %0 : i1 to i32
    %c0_i32_0 = arith.constant 0 : i32
    %2 = arith.cmpi ne, %1, %c0_i32_0 : i32
    scf.if %2 {
      %cst_14 = arith.constant 0.000000e+00 : f32
      %28 = vector.broadcast %cst_14 : f32 to vector<8x1xf32>
      %c0_15 = arith.constant 0 : index
      %c0_16 = arith.constant 0 : index
      %29 = vector.load %arg5[%c0_15, %c0_16] : memref<8x1xf32, #tpu.memory_space<vmem>>, vector<8x1xf32>
      tpu.vector_store %arg5[%c0_15, %c0_16], %28 {strides = array<i32>} : memref<8x1xf32, #tpu.memory_space<vmem>>, vector<8x1xf32>,
    } else {
    }
    %c0 = arith.constant 0 : index
    %c0_1 = arith.constant 0 : index
    %3 = vector.load %arg2[%c0, %c0_1] : memref<8x32xf32, #tpu.memory_space<vmem>>, vector<8x32xf32>
    %c0_2 = arith.constant 0 : index
    %c0_3 = arith.constant 0 : index
    %4 = vector.load %arg3[%c0_2, %c0_3] : memref<8x32xf32, #tpu.memory_space<vmem>>, vector<8x32xf32>
    %5 = arith.mulf %3, %4 : vector<8x32xf32>
    %cst = arith.constant dense<0.000000e+00> : vector<8xf32>
    %6 = vector.multi_reduction <add>, %5, %cst [1] : vector<8x32xf32> to vector<8xf32>
    %7 = vector.shape_cast %6 : vector<8xf32> to vector<8x1xf32>
    %8 = arith.mulf %3, %3 : vector<8x32xf32>
    %cst_4 = arith.constant dense<0.000000e+00> : vector<8xf32>
    %9 = vector.multi_reduction <add>, %8, %cst_4 [1] : vector<8x32xf32> to vector<8xf32>
    %10 = vector.shape_cast %9 : vector<8xf32> to vector<8x1xf32>
    %11 = arith.mulf %4, %4 : vector<8x32xf32>
    %cst_5 = arith.constant dense<0.000000e+00> : vector<8xf32>
    %12 = vector.multi_reduction <add>, %11, %cst_5 [1] : vector<8x32xf32> to vector<8xf32>
    %13 = vector.shape_cast %12 : vector<8xf32> to vector<8x1xf32>
    %cst_6 = arith.constant 1.000000e-24 : f32
    %14 = vector.broadcast %cst_6 : f32 to vector<8x1xf32>
    %15 = arith.maximumf %10, %14 : vector<8x1xf32>
    %16 = math.rsqrt %15 : vector<8x1xf32>
    %17 = arith.mulf %7, %16 : vector<8x1xf32>
    %cst_7 = arith.constant 1.000000e-24 : f32
    %18 = vector.broadcast %cst_7 : f32 to vector<8x1xf32>
    %19 = arith.maximumf %13, %18 : vector<8x1xf32>
    %20 = math.rsqrt %19 : vector<8x1xf32>
    %21 = arith.mulf %17, %20 : vector<8x1xf32>
    %c0_8 = arith.constant 0 : index
    %c0_9 = arith.constant 0 : index
    %22 = vector.load %arg5[%c0_8, %c0_9] : memref<8x1xf32, #tpu.memory_space<vmem>>, vector<8x1xf32>
    %23 = arith.addf %22, %21 : vector<8x1xf32>
    %c0_10 = arith.constant 0 : index
    %c0_11 = arith.constant 0 : index
    %24 = vector.load %arg5[%c0_10, %c0_11] : memref<8x1xf32, #tpu.memory_space<vmem>>, vector<8x1xf32>
    tpu.vector_store %arg5[%c0_10, %c0_11], %23 {strides = array<i32>} : memref<8x1xf32, #tpu.memory_space<vmem>>, vector<8x1xf32>,
    %c0_i32_12 = arith.constant 0 : i32
    %25 = arith.cmpi eq, %arg1, %c0_i32_12 : i32
    %26 = arith.extui %25 : i1 to i32
    %c0_i32_13 = arith.constant 0 : i32
    %27 = arith.cmpi ne, %26, %c0_i32_13 : i32
    scf.if %27 {
      %c0_14 = arith.constant 0 : index
      %c0_15 = arith.constant 0 : index
      %28 = vector.load %arg5[%c0_14, %c0_15] : memref<8x1xf32, #tpu.memory_space<vmem>>, vector<8x1xf32>
      %29 = vector.shape_cast %28 : vector<8x1xf32> to vector<1x8x1xf32>
      %cst_16 = arith.constant dense<0.000000e+00> : vector<1xf32>
      %30 = vector.multi_reduction <add>, %29, %cst_16 [1, 2] : vector<1x8x1xf32> to vector<1xf32>
      %31 = vector.shape_cast %30 : vector<1xf32> to vector<1x1x1xf32>
      %32 = vector.extract %31[0, 0, 0] : f32 from vector<1x1x1xf32>
      %cst_17 = arith.constant -1.250000e-01 : f32
      %33 = arith.mulf %32, %cst_17 : f32
      %34 = vector.broadcast %33 : f32 to vector<1x128xf32>
      %c0_18 = arith.constant 0 : index
      %c0_19 = arith.constant 0 : index
      %35 = vector.load %arg4[%c0_18, %c0_19] : memref<1x128xf32, #tpu.memory_space<vmem>>, vector<1x128xf32>
      tpu.vector_store %arg4[%c0_18, %c0_19], %34 {strides = array<i32>} : memref<1x128xf32, #tpu.memory_space<vmem>>, vector<1x128xf32>,
    } else {
    }
    return
  }
  func.func @transform_0(%arg0: i32, %arg1: i32) -> (i32, i32) {
    %c1_i32 = arith.constant 1 : i32
    %0 = arith.muli %arg0, %c1_i32 : i32
    %1 = arith.addi %0, %arg1 : i32
    %c0_i32 = arith.constant 0 : i32
    %2 = arith.minsi %1, %c0_i32 : i32
    %c0_i32_0 = arith.constant 0 : i32
    %c0_i32_1 = arith.constant 0 : i32
    return %2, %c0_i32_0 : i32, i32
  }
  func.func @transform_1(%arg0: i32, %arg1: i32) -> (i32, i32) {
    %c1_i32 = arith.constant 1 : i32
    %0 = arith.muli %arg0, %c1_i32 : i32
    %1 = arith.addi %0, %arg1 : i32
    %c0_i32 = arith.constant 0 : i32
    %2 = arith.minsi %1, %c0_i32 : i32
    %c0_i32_0 = arith.constant 0 : i32
    %c0_i32_1 = arith.constant 0 : i32
    return %2, %c0_i32_0 : i32, i32
  }
  func.func @transform_2(%arg0: i32, %arg1: i32) -> (i32, i32) {
    %c0_i32 = arith.constant 0 : i32
    %c0_i32_0 = arith.constant 0 : i32
    return %c0_i32, %arg0 : i32, i32
  }
}

</mosaic_0001>

<llo_original>
// kernel: tpu_custom_call.1
$region0: #{tpu_custom_call.1}
  #allocation0 [shape = 'u32[]', space=smem, size = 0x4, offset = 0x4, fixed_abs, tag = 'smem constant byte address 0x4 - core index']
  #allocation1 [shape = 'u32[72,128]{1,0:T(1,128)}', space=vmem, size = 0x9000, scoped, tag = 'internal scratch']
  #allocation2 [shape = 'f32[8,1]{1,0:T(8,128)}', space=vmem, size = 0x1000, scoped, tag = 'scratch operand']
  %s0 = inlined_call_operand.hbm [shape: f32[8,32], index: 0, kind: input, shape index: {}]
  %s1 = inlined_call_operand.hbm [shape: f32[8,32], index: 1, kind: input, shape index: {}]
  %s2 = inlined_call_operand.hbm [shape: f32[1,128], index: 2, kind: output, shape index: {}]
  %s3 = sld [smem:[#allocation0]]
  $region34: #{tpu_custom_call.1} parent=0
    _
  %s5 = ssub.s32 1, %s3
  %s6 = scalar_select 0, %s5, %s3
  $region1: #{tpu_custom_call.1} parent=0
    #allocation3 [shape = 'u8[4096]{0}', space=vmem, size = 0x1000, scoped, tag = 'input window, operand 0, single buffered']
    #allocation4 [shape = 's32[1]{0}', space=sflag, size = 0x4, scoped, tag = 'scoped memory for tpu_custom_call.1']
    #allocation5 [shape = 's32[1]{0}', space=sflag, size = 0x4, scoped, tag = 'scoped memory for tpu_custom_call.1']
    #allocation6 [shape = 'u8[4096]{0}', space=vmem, size = 0x1000, scoped, tag = 'input window, operand 1, single buffered']
    #allocation7 [shape = 's32[1]{0}', space=sflag, size = 0x4, scoped, tag = 'scoped memory for tpu_custom_call.1']
    #allocation8 [shape = 'u8[512]{0}', space=vmem, size = 0x400, scoped, tag = 'output window, operand 0, single buffered']
    %7 = vsyncpa [#allocation4], 0
    %8 = vsyncpa [#allocation7], 0
    %9 = vsyncpa [#allocation5], 0
    // Predicated region
    $region2: #{tpu_custom_call.1} parent=1 // pred_check
      _
    $region3: #{tpu_custom_call.1} parent=1 // pred_check_branch
      %11 = sbr.rel (0) target = $region5
    $region4: #{tpu_custom_call.1} parent=1 // pred_region
      %s12 = sadd.s32 0, 0
      %p13 = scmp.lt.s32.totalorder %s12, 0
      %s14 = scalar_select %p13, %s12, 0
      %16 = vsyncadd [#allocation4], 0
      %s17 = smul.addr %s14, 8
      %s18 = scalar_lea.hbm %s0, %s17
      %s20 = sshll.u32 %s18, 4
      %s21 = int_to_ptr.hbm [resolvable:$true] %s20
      %s22 = sshll.u32 [#allocation3], 4
      %s23 = int_to_ptr.vmem [resolvable:$true] %s22
      %25 = dma.hbm_to_vmem [thread:$0]  %s21, 128, %s23, [#allocation4]
    $region5: #{tpu_custom_call.1} parent=1 // pred_fallthru
      _
    // Predicated region
    $region6: #{tpu_custom_call.1} parent=1 // pred_check
      _
    $region7: #{tpu_custom_call.1} parent=1 // pred_check_branch
      %27 = sbr.rel (0) target = $region9
    $region8: #{tpu_custom_call.1} parent=1 // pred_region
      %s28 = sadd.s32 0, 0
      %p29 = scmp.lt.s32.totalorder %s28, 0
      %s30 = scalar_select %p29, %s28, 0
      %32 = vsyncadd [#allocation7], 0
      %s33 = smul.addr %s30, 8
      %s34 = scalar_lea.hbm %s1, %s33
      %s36 = sshll.u32 %s34, 4
      %s37 = int_to_ptr.hbm [resolvable:$true] %s36
      %s38 = sshll.u32 [#allocation6], 4
      %s39 = int_to_ptr.vmem [resolvable:$true] %s38
      %41 = dma.hbm_to_vmem [thread:$0]  %s37, 128, %s39, [#allocation7]
    $region9: #{tpu_custom_call.1} parent=1 // pred_fallthru
      _
    // Predicated region
    $region10: #{tpu_custom_call.1} parent=1 // pred_check
      _
    $region11: #{tpu_custom_call.1} parent=1 // pred_check_branch
      %43 = sbr.rel (0) target = $region13
    $region12: #{tpu_custom_call.1} parent=1 // pred_region
      %45 = dma.done [#allocation4], 128
    $region13: #{tpu_custom_call.1} parent=1 // pred_fallthru
      _
    // Predicated region
    $region14: #{tpu_custom_call.1} parent=1 // pred_check
      _
    $region15: #{tpu_custom_call.1} parent=1 // pred_check_branch
      %47 = sbr.rel (0) target = $region17
    $region16: #{tpu_custom_call.1} parent=1 // pred_region
      %49 = dma.done [#allocation7], 128
    $region17: #{tpu_custom_call.1} parent=1 // pred_fallthru
      _
    %s50 = sadd.s32 0, 0
    %p51 = scmp.lt.s32.totalorder %s50, 0
    %s52 = scalar_select %p51, %s50, 0
    %s53 = sadd.s32 0, 0
    %p54 = scmp.lt.s32.totalorder %s53, 0
    %s55 = scalar_select %p54, %s53, 0
    %p56 = scmp.eq.s32.totalorder 0, 0
    // Predicated region
    $region18: #{tpu_custom_call.1} parent=1 // pred_check
      %p57 = pneg %p56
    $region19: #{tpu_custom_call.1} parent=1 // pred_check_branch
      %59 = sbr.rel (%p57) target = $region21
    $region20: #{tpu_custom_call.1} parent=1 // pred_region
      %vm60 = vcmask 7168
      %61 = vst.msk [vmem:[#allocation2] sm:$0xff] %vm60, 0.0
    $region21: #{tpu_custom_call.1} parent=1 // pred_fallthru
      _
    %v62 = vld [vmem:[#allocation3] sm:$0xff]
    %v63 = vld [vmem:[#allocation6] sm:$0xff]
    %v64 = vmul.f32 %v62, %v63
    %vm65 = vcmask 261120
    %v66 = vsel %vm65, %v64, 0.0
    %67 = vadd.xlane.f32.xlu0 %v66
    %v68 = vpop.xlane.xlu0 %67
    %v69 = vmul.f32 %v62, %v62
    %v70 = vsel %vm65, %v69, 0.0
    %71 = vadd.xlane.f32.xlu0 %v70
    %v72 = vpop.xlane.xlu0 %71
    %v73 = vmul.f32 %v63, %v63
    %v74 = vsel %vm65, %v73, 0.0
    %75 = vadd.xlane.f32.xlu0 %v74
    %v76 = vpop.xlane.xlu0 %75
    %v77 = vmax.f32 %v72, 1e-24
    %v78 = vrsqrt.pop %v77
    %v79 = vmul.f32 %v78, %v77
    %v80 = vmul.f32 %v79, %v78
    %v81 = vmul.f32 0.5, %v80
    %v82 = vsub.f32 1.5, %v81
    %v83 = vmul.f32 %v78, %v82
    %vm84 = vweird.f32 %v77
    %vm85 = vweird.f32 %v78
    %vm86 = vmor %vm84, %vm85
    %v87 = vsel %vm86, %v78, %v83
    %v88 = vmul.f32 %v68, %v87
    %v89 = vmax.f32 %v76, 1e-24
    %v90 = vrsqrt.pop %v89
    %v91 = vmul.f32 %v90, %v89
    %v92 = vmul.f32 %v91, %v90
    %v93 = vmul.f32 0.5, %v92
    %v94 = vsub.f32 1.5, %v93
    %v95 = vmul.f32 %v90, %v94
    %vm96 = vweird.f32 %v89
    %vm97 = vweird.f32 %v90
    %vm98 = vmor %vm96, %vm97
    %v99 = vsel %vm98, %v90, %v95
    %v100 = vmul.f32 %v88, %v99
    %v101 = vld [vmem:[#allocation2] sm:$0xff]
    %v102 = vadd.f32 %v101, %v100
    %vm103 = vcmask 7168
    %104 = vst.msk [vmem:[#allocation2] sm:$0xff] %vm103, %v102
    // Predicated region
    $region22: #{tpu_custom_call.1} parent=1 // pred_check
      %p105 = pneg %p56
    $region23: #{tpu_custom_call.1} parent=1 // pred_check_branch
      %107 = sbr.rel (%p105) target = $region25
    $region24: #{tpu_custom_call.1} parent=1 // pred_region
      %v108 = vld [vmem:[#allocation2] sm:$0xff]
      %v109 = vsel %vm103, %v108, 0.0
      %110 = vadd.xlane.f32.xlu0 %v109
      %v111 = vpop.xlane.xlu0 %110
      %v112 = vrot.slane %v111, 4
      %v113 = vadd.f32 %v111, %v112
      %v114 = vrot.slane %v113, 2
      %v115 = vadd.f32 %v113, %v114
      %v116 = vrot.slane %v115, 1
      %v117 = vadd.f32 %v115, %v116
      %s118 = vtos %v117
      %s119 = smul.f32 %s118, -0.125
      %v120 = vstv %s119
      %121 = vst [vmem:[#allocation8] sm:$0x1] %v120
    $region25: #{tpu_custom_call.1} parent=1 // pred_fallthru
      _
    // Predicated region
    $region26: #{tpu_custom_call.1} parent=1 // pred_check
      _
    $region27: #{tpu_custom_call.1} parent=1 // pred_check_branch
      %123 = sbr.rel (0) target = $region29
    $region28: #{tpu_custom_call.1} parent=1 // pred_region
      %125 = vsyncadd [#allocation5], 0
      %s127 = sshll.u32 [#allocation8], 4
      %s128 = int_to_ptr.vmem [resolvable:$true] %s127
      %s129 = sshll.u32 %s2, 4
      %s130 = int_to_ptr.hbm [resolvable:$true] %s129
      %132 = dma.vmem_to_hbm [thread:$0]  %s128, 16, %s130, [#allocation5]
    $region29: #{tpu_custom_call.1} parent=1 // pred_fallthru
      _
    // Predicated region
    $region30: #{tpu_custom_call.1} parent=1 // pred_check
      _
    $region31: #{tpu_custom_call.1} parent=1 // pred_check_branch
      %134 = sbr.rel (0) target = $region33
    $region32: #{tpu_custom_call.1} parent=1 // pred_region
      %136 = dma.done [#allocation5], 16
    $region33: #{tpu_custom_call.1} parent=1 // pred_fallthru
      _
    %137 = vsyncpa [#allocation4], 1
    %138 = vsyncpa [#allocation7], 1
    %139 = vsyncpa [#allocation5], 1

</llo_original>
